<compile_context>
chip_gen: v6e
topology: v6e:2x2x1
jax: 0.10.0
libtpu: 0.0.40
codegen_flags: <defaults>
</compile_context>

<pallas_src>
import functools

import jax
import jax.numpy as jnp
import numpy as np
from jax.experimental import pallas as pl
from jax.experimental.pallas import tpu as pltpu


def _round_up(a, m):
    return (a + m - 1) // m * m


@functools.lru_cache(maxsize=None)
def _vmem_limit_bytes():
    """~75% of this chip's physical VMEM (v7x-safe fallback if unknown)."""
    cap = 64 * 1024 * 1024  # v7x has the smallest VMEM -> safe everywhere
    try:
        cap = int(getattr(pltpu.get_tpu_info(), "vmem_capacity_bytes", cap))
    except Exception:
        pass
    return (cap * 3) // 4


def _pick_tile(dim, quantum, max_tile):
    """Tile size (multiple of `quantum`) minimizing padding; ties -> larger."""
    t_full = _round_up(dim, quantum)
    if t_full <= max_tile:
        return t_full
    best_t, best_pad = quantum, _round_up(dim, quantum)
    for t in range(quantum, max_tile + 1, quantum):
        pad = _round_up(dim, t)
        if pad < best_pad or (pad == best_pad and t > best_t):
            best_t, best_pad = t, pad
    return best_t


def _matmul_bias_kernel(x_ref, w_ref, b_ref, o_ref, acc_ref):
    # x_ref: (tm, tk)  w_ref: (tk, tn)  b_ref: (1, tn)  o_ref: (tm, tn)
    k = pl.program_id(2)

    @pl.when(k == 0)
    def _():
        acc_ref[...] = jnp.zeros_like(acc_ref)

    acc_ref[...] += jnp.dot(x_ref[...], w_ref[...],
                            preferred_element_type=jnp.float32)

    @pl.when(k == pl.num_programs(2) - 1)
    def _():
        o_ref[...] = (acc_ref[...] + b_ref[...]).astype(o_ref.dtype)


def _matmul_bias(x, w, bias_row, *, out_dtype, compute_dtype=None,
                 max_tm=512, max_tn=512, max_tk=2048):
    """Returns (x @ w + bias_row) via a tiled, pipelined Pallas MXU matmul."""
    m, k_dim = x.shape
    k2, n = w.shape
    assert k2 == k_dim and bias_row.shape == (1, n)

    cdt = jnp.dtype(compute_dtype) if compute_dtype is not None else jnp.dtype(x.dtype)
    in_isz = max(cdt.itemsize, 2)
    out_isz = jnp.dtype(out_dtype).itemsize
    m_q = 8 if in_isz >= 4 else 16          # sublane quantum (f32: 8, bf16: 16)

    # ---- tile selection against the per-chip VMEM budget ----
    vmem_limit = _vmem_limit_bytes()
    tile_budget = int(vmem_limit * 0.8)

    tm = _pick_tile(m, m_q, max_tm)
    tn = _pick_tile(n, 128, max_tn)
    tk = _pick_tile(k_dim, 128, max_tk)

    def vmem_bytes(tm_, tn_, tk_):
        return (2 * tm_ * tk_ * in_isz        # x block (double-buffered)
                + 2 * tk_ * tn_ * in_isz      # weight block (budgeted at 2x even
                                              #   when single-buffered below)
                + 2 * tn_ * 4                 # bias block
                + 2 * tm_ * tn_ * out_isz     # output block
                + tm_ * tn_ * 4)              # f32 accumulator scratch

    while vmem_bytes(tm, tn, tk) > tile_budget:
        if tk > 128:
            tk = max(128, tk // 2 // 128 * 128)
        elif tn > 128:
            tn = max(128, tn // 2 // 128 * 128)
        elif tm > m_q:
            tm = max(m_q, tm // 2 // m_q * m_q)
        else:
            break

    m_pad = _round_up(m, tm)
    n_pad = _round_up(n, tn)
    k_pad = _round_up(k_dim, tk)

    # v7x megacore: guarantee >= 2 steps on a "parallel" axis when possible.
    if (m_pad // tm) * (n_pad // tn) == 1 and m_pad // 2 >= m_q:
        tm = _round_up(-(-m // 2), m_q)
        m_pad = _round_up(m, tm)

    gm, gn, gk = m_pad // tm, n_pad // tn, k_pad // tk

    # ---- zero-pad to lane/sublane-aligned, tile-divisible shapes ----
    # (wrapper layout plumbing; the zero padding is exact for the contraction)
    x_p = jnp.pad(x, ((0, m_pad - m), (0, k_pad - k_dim))).astype(cdt)
    w_p = jnp.pad(w, ((0, k_pad - k_dim), (0, n_pad - n))).astype(cdt)
    b_p = jnp.pad(bias_row, ((0, 0), (0, n_pad - n))).astype(jnp.float32)

    cost = pl.CostEstimate(
        flops=2 * m_pad * k_pad * n_pad,
        transcendentals=0,
        bytes_accessed=((m_pad * k_pad + k_pad * n_pad) * in_isz
                        + n_pad * 4 + m_pad * n_pad * out_isz),
    )

    def build(single_buffer):
        # Single-buffer blocks whose index_map is constant over the whole grid
        # (no need to double-buffer a block that is never re-fetched).
        w_kw = ({"pipeline_mode": pl.Buffered(1)}
                if single_buffer and gn == 1 and gk == 1 else {})
        b_kw = ({"pipeline_mode": pl.Buffered(1)}
                if single_buffer and gn == 1 else {})
        return pl.pallas_call(
            _matmul_bias_kernel,
            out_shape=jax.ShapeDtypeStruct((m_pad, n_pad), out_dtype),
            grid_spec=pltpu.PrefetchScalarGridSpec(
                num_scalar_prefetch=0,
                grid=(gm, gn, gk),
                in_specs=[
                    pl.BlockSpec((tm, tk), lambda i, j, kk: (i, kk)),
                    pl.BlockSpec((tk, tn), lambda i, j, kk: (kk, j), **w_kw),
                    pl.BlockSpec((1, tn), lambda i, j, kk: (0, j), **b_kw),
                ],
                out_specs=pl.BlockSpec((tm, tn), lambda i, j, kk: (i, j)),
                scratch_shapes=[pltpu.VMEM((tm, tn), jnp.float32)],
            ),
            compiler_params=pltpu.CompilerParams(
                dimension_semantics=("parallel", "parallel", "arbitrary"),
                vmem_limit_bytes=vmem_limit,
            ),
            cost_estimate=cost,
        )

    if gn == 1:
        try:
            out = build(True)(x_p, w_p, b_p)
        except Exception:
            # This jax/Mosaic build rejects pl.Buffered(1); default double
            # buffering still fits the VMEM budget computed above.
            out = build(False)(x_p, w_p, b_p)
    else:
        out = build(False)(x_p, w_p, b_p)

    return out[:m, :n]


def graph_conv(x, weight, bias, A, *, compute_dtype=None, fold_flop_ratio=1.5):
    """x: (N, C_in, V); weight: (K*C_out, C_in); bias: (K*C_out,); A: (K, V, W)."""
    n, c_in, v = x.shape
    k_size, v_a, w_dim = A.shape
    kc = weight.shape[0]
    assert v_a == v and weight.shape[1] == c_in and kc % k_size == 0
    c_out = kc // k_size

    f32 = jnp.float32
    hi = jax.lax.Precision.HIGHEST
    out_dtype = x.dtype

    # FLOP inflation of the folded single-matmul form vs the two-stage form.
    ratio = (c_in * w_dim) / (k_size * (c_in + w_dim))

    if ratio <= fold_flop_ratio:
        # ---- folded path: one matmul against a parameter-only matrix ----
        #   G[(ci,v),(c,w)]  = sum_k W[k*C_out+c, ci] * A[k,v,w]
        #   bias_fold[(c,w)] = sum_k b[k*C_out+c] * sum_v A[k,v,w]
        w_r = weight.astype(f32).reshape(k_size, c_out, c_in)
        g = jnp.einsum('kci,kvw->ivcw', w_r, A.astype(f32), precision=hi)
        g = g.reshape(c_in * v, c_out * w_dim)
        bias_fold = jnp.einsum('kc,kw->cw',
                               bias.astype(f32).reshape(k_size, c_out),
                               A.astype(f32).sum(axis=1),
                               precision=hi).reshape(1, c_out * w_dim)
        x2 = x.reshape(n, c_in * v)                 # free row-major reshape
        out2 = _matmul_bias(x2, g, bias_fold, out_dtype=out_dtype,
                            compute_dtype=compute_dtype)
        return out2.reshape(n, c_out, w_dim)

    # ---- two-stage path (wide layers: avoid the fold's FLOP inflation) ----
    # stage 1: 1x1 conv as (N*V, C_in) @ (C_in, K*C_out) + bias
    xt = jnp.transpose(x, (0, 2, 1)).reshape(n * v, c_in)
    y = _matmul_bias(xt,
                     jnp.transpose(weight, (1, 0)).astype(f32),
                     bias.astype(f32).reshape(1, kc),
                     out_dtype=f32, compute_dtype=compute_dtype)
    # stage 2: adjacency contraction as (N*C_out, K*V) @ (K*V, W)
    y2 = jnp.transpose(y.reshape(n, v, k_size, c_out), (0, 3, 2, 1))
    y2 = y2.reshape(n * c_out, k_size * v)
    a_flat = A.astype(f32).reshape(k_size * v, w_dim)
    out2 = _matmul_bias(y2, a_flat, jnp.zeros((1, w_dim), f32),
                        out_dtype=out_dtype, compute_dtype=compute_dtype)
    return out2.reshape(n, c_out, w_dim)


def graph_conv_ref(x, weight, bias, A):
    n, c_in, v = x.shape
    k_size = A.shape[0]
    c_out = weight.shape[0] // k_size
    hi = jax.lax.Precision.HIGHEST
    y = jnp.einsum('oc,ncv->nov', weight, x, precision=hi) + bias[None, :, None]
    y = y.reshape(n, k_size, c_out, v)
    return jnp.einsum('nkcv,kvw->ncw', y, A, precision=hi)


if __name__ == "__main__":
    key = jax.random.PRNGKey(0)

    # --- test 1: small shapes (folded single-matmul path), f32 ---
    N, C_IN, C_OUT, V, K = 2, 4, 8, 16, 3
    k1, k2, k3, k4, k5 = jax.random.split(key, 5)
    x = jax.random.normal(k1, (N, C_IN, V), dtype=jnp.float32)
    weight = jax.random.normal(k2, (K * C_OUT, C_IN), dtype=jnp.float32) * 0.1
    bias = jax.random.normal(k3, (K * C_OUT,), dtype=jnp.float32) * 0.1
    A = jax.random.uniform(k4, (K, V, V), dtype=jnp.float32)

    out = jax.block_until_ready(graph_conv(x, weight, bias, A))
    ref = graph_conv_ref(x, weight, bias, A)
    np.testing.assert_allclose(np.asarray(out), np.asarray(ref),
                               rtol=1e-5, atol=1e-5)

    # --- test 1b: same shapes, bf16 MXU operands with f32 accumulation ---
    out_bf16 = jax.block_until_ready(
        graph_conv(x, weight, bias, A, compute_dtype=jnp.bfloat16))
    np.testing.assert_allclose(np.asarray(out_bf16), np.asarray(ref),
                               rtol=2e-2, atol=2e-2)

    # --- test 2: wider channels -> FLOP-ratio gate selects the two-stage path ---
    N2, C_IN2, C_OUT2, V2 = 2, 64, 32, 16
    kx2, kw2, kb2, ka2 = jax.random.split(k5, 4)
    x_w = jax.random.normal(kx2, (N2, C_IN2, V2), dtype=jnp.float32)
    weight_w = jax.random.normal(kw2, (K * C_OUT2, C_IN2), dtype=jnp.float32) * 0.05
    bias_w = jax.random.normal(kb2, (K * C_OUT2,), dtype=jnp.float32) * 0.1
    A_w = jax.random.uniform(ka2, (K, V2, V2), dtype=jnp.float32)

    out_w = jax.block_until_ready(graph_conv(x_w, weight_w, bias_w, A_w))
    ref_w = graph_conv_ref(x_w, weight_w, bias_w, A_w)
    np.testing.assert_allclose(np.asarray(out_w), np.asarray(ref_w),
                               rtol=1e-4, atol=1e-4)

    print("KERNEL_OK")
</pallas_src>

<mosaic_0001>
module attributes {stable_mosaic.version = 11 : i64} {
  func.func @_matmul_bias_kernel(%arg0: i32, %arg1: i32, %arg2: i32, %arg3: memref<8x128xf32, #tpu.memory_space<vmem>>, %arg4: memref<128x128xf32, #tpu.memory_space<vmem>>, %arg5: memref<1x128xf32, #tpu.memory_space<vmem>>, %arg6: memref<8x128xf32, #tpu.memory_space<vmem>>, %arg7: memref<8x128xf32, #tpu.memory_space<vmem>>) attributes {dimension_semantics = [#tpu.dimension_semantics<parallel>, #tpu.dimension_semantics<parallel>, #tpu.dimension_semantics<arbitrary>], iteration_bounds = array<i64: 1, 1, 1>, scalar_prefetch = 0 : i64, scratch_operands = 1 : i64, tpu.core_type = #tpu.core_type<tc>, window_params = [{transform_indices = @transform_0, window_bounds = array<i64: 8, 128>}, {pipeline_mode = #tpu.pipeline_mode<synchronous>, transform_indices = @transform_1, window_bounds = array<i64: 128, 128>}, {pipeline_mode = #tpu.pipeline_mode<synchronous>, transform_indices = @transform_2, window_bounds = array<i64: 1, 128>}, {transform_indices = @transform_3, window_bounds = array<i64: 8, 128>}]} {
    %c0_i32 = arith.constant 0 : i32
    %0 = arith.cmpi eq, %arg2, %c0_i32 : i32
    %1 = arith.extui %0 : i1 to i32
    %c0_i32_0 = arith.constant 0 : i32
    %2 = arith.cmpi ne, %1, %c0_i32_0 : i32
    scf.if %2 {
      %cst_10 = arith.constant 0.000000e+00 : f32
      %12 = vector.broadcast %cst_10 : f32 to vector<8x128xf32>
      %c0_11 = arith.constant 0 : index
      %c0_12 = arith.constant 0 : index
      %13 = vector.load %arg7[%c0_11, %c0_12] : memref<8x128xf32, #tpu.memory_space<vmem>>, vector<8x128xf32>
      tpu.vector_store %arg7[%c0_11, %c0_12], %12 {strides = array<i32>} : memref<8x128xf32, #tpu.memory_space<vmem>>, vector<8x128xf32>,
    } else {
    }
    %c0 = arith.constant 0 : index
    %c0_1 = arith.constant 0 : index
    %3 = vector.load %arg7[%c0, %c0_1] : memref<8x128xf32, #tpu.memory_space<vmem>>, vector<8x128xf32>
    %c0_2 = arith.constant 0 : index
    %c0_3 = arith.constant 0 : index
    %4 = vector.load %arg3[%c0_2, %c0_3] : memref<8x128xf32, #tpu.memory_space<vmem>>, vector<8x128xf32>
    %c0_4 = arith.constant 0 : index
    %c0_5 = arith.constant 0 : index
    %5 = vector.load %arg4[%c0_4, %c0_5] : memref<128x128xf32, #tpu.memory_space<vmem>>, vector<128x128xf32>
    %cst = arith.constant dense<0.000000e+00> : vector<8x128xf32>
    %6 = tpu.matmul %4, %5, %cst {dimension_numbers = #tpu.dot_dimension_numbers<[1], [0], [0], [1], [0, 0, 1, 1], [], []>} : vector<8x128xf32>, vector<128x128xf32>, vector<8x128xf32> -> vector<8x128xf32>
    %7 = arith.addf %3, %6 : vector<8x128xf32>
    %c0_6 = arith.constant 0 : index
    %c0_7 = arith.constant 0 : index
    %8 = vector.load %arg7[%c0_6, %c0_7] : memref<8x128xf32, #tpu.memory_space<vmem>>, vector<8x128xf32>
    tpu.vector_store %arg7[%c0_6, %c0_7], %7 {strides = array<i32>} : memref<8x128xf32, #tpu.memory_space<vmem>>, vector<8x128xf32>,
    %c0_i32_8 = arith.constant 0 : i32
    %9 = arith.cmpi eq, %arg2, %c0_i32_8 : i32
    %10 = arith.extui %9 : i1 to i32
    %c0_i32_9 = arith.constant 0 : i32
    %11 = arith.cmpi ne, %10, %c0_i32_9 : i32
    scf.if %11 {
      %c0_10 = arith.constant 0 : index
      %c0_11 = arith.constant 0 : index
      %12 = vector.load %arg7[%c0_10, %c0_11] : memref<8x128xf32, #tpu.memory_space<vmem>>, vector<8x128xf32>
      %c0_12 = arith.constant 0 : index
      %c0_13 = arith.constant 0 : index
      %13 = vector.load %arg5[%c0_12, %c0_13] : memref<1x128xf32, #tpu.memory_space<vmem>>, vector<1x128xf32>
      %14 = vector.broadcast %13 : vector<1x128xf32> to vector<8x128xf32>
      %15 = arith.addf %12, %14 : vector<8x128xf32>
      %c0_14 = arith.constant 0 : index
      %c0_15 = arith.constant 0 : index
      %16 = vector.load %arg6[%c0_14, %c0_15] : memref<8x128xf32, #tpu.memory_space<vmem>>, vector<8x128xf32>
      tpu.vector_store %arg6[%c0_14, %c0_15], %15 {strides = array<i32>} : memref<8x128xf32, #tpu.memory_space<vmem>>, vector<8x128xf32>,
    } else {
    }
    return
  }
  func.func @transform_0(%arg0: i32, %arg1: i32, %arg2: i32) -> (i32, i32) {
    %c0_i32 = arith.constant 0 : i32
    return %arg0, %arg2 : i32, i32
  }
  func.func @transform_1(%arg0: i32, %arg1: i32, %arg2: i32) -> (i32, i32) {
    %c0_i32 = arith.constant 0 : i32
    return %arg2, %arg1 : i32, i32
  }
  func.func @transform_2(%arg0: i32, %arg1: i32, %arg2: i32) -> (i32, i32) {
    %c0_i32 = arith.constant 0 : i32
    %c0_i32_0 = arith.constant 0 : i32
    return %c0_i32, %arg1 : i32, i32
  }
  func.func @transform_3(%arg0: i32, %arg1: i32, %arg2: i32) -> (i32, i32) {
    %c0_i32 = arith.constant 0 : i32
    return %arg0, %arg1 : i32, i32
  }
}

module attributes {stable_mosaic.version = 11 : i64} {
  func.func @_matmul_bias_kernel(%arg0: i32, %arg1: i32, %arg2: i32, %arg3: memref<8x128xf32, #tpu.memory_space<vmem>>, %arg4: memref<128x128xf32, #tpu.memory_space<vmem>>, %arg5: memref<1x128xf32, #tpu.memory_space<vmem>>, %arg6: memref<8x128xf32, #tpu.memory_space<vmem>>, %arg7: memref<8x128xf32, #tpu.memory_space<vmem>>) attributes {dimension_semantics = [#tpu.dimension_semantics<parallel>, #tpu.dimension_semantics<parallel>, #tpu.dimension_semantics<arbitrary>], iteration_bounds = array<i64: 1, 1, 1>, scalar_prefetch = 0 : i64, scratch_operands = 1 : i64, tpu.core_type = #tpu.core_type<tc>, window_params = [{transform_indices = @transform_0, window_bounds = array<i64: 8, 128>}, {transform_indices = @transform_1, window_bounds = array<i64: 128, 128>}, {transform_indices = @transform_2, window_bounds = array<i64: 1, 128>}, {transform_indices = @transform_3, window_bounds = array<i64: 8, 128>}]} {
    %c0_i32 = arith.constant 0 : i32
    %0 = arith.cmpi eq, %arg2, %c0_i32 : i32
    %1 = arith.extui %0 : i1 to i32
    %c0_i32_0 = arith.constant 0 : i32
    %2 = arith.cmpi ne, %1, %c0_i32_0 : i32
    scf.if %2 {
      %cst_10 = arith.constant 0.000000e+00 : f32
      %12 = vector.broadcast %cst_10 : f32 to vector<8x128xf32>
      %c0_11 = arith.constant 0 : index
      %c0_12 = arith.constant 0 : index
      %13 = vector.load %arg7[%c0_11, %c0_12] : memref<8x128xf32, #tpu.memory_space<vmem>>, vector<8x128xf32>
      tpu.vector_store %arg7[%c0_11, %c0_12], %12 {strides = array<i32>} : memref<8x128xf32, #tpu.memory_space<vmem>>, vector<8x128xf32>,
    } else {
    }
    %c0 = arith.constant 0 : index
    %c0_1 = arith.constant 0 : index
    %3 = vector.load %arg7[%c0, %c0_1] : memref<8x128xf32, #tpu.memory_space<vmem>>, vector<8x128xf32>
    %c0_2 = arith.constant 0 : index
    %c0_3 = arith.constant 0 : index
    %4 = vector.load %arg3[%c0_2, %c0_3] : memref<8x128xf32, #tpu.memory_space<vmem>>, vector<8x128xf32>
    %c0_4 = arith.constant 0 : index
    %c0_5 = arith.constant 0 : index
    %5 = vector.load %arg4[%c0_4, %c0_5] : memref<128x128xf32, #tpu.memory_space<vmem>>, vector<128x128xf32>
    %cst = arith.constant dense<0.000000e+00> : vector<8x128xf32>
    %6 = tpu.matmul %4, %5, %cst {dimension_numbers = #tpu.dot_dimension_numbers<[1], [0], [0], [1], [0, 0, 1, 1], [], []>} : vector<8x128xf32>, vector<128x128xf32>, vector<8x128xf32> -> vector<8x128xf32>
    %7 = arith.addf %3, %6 : vector<8x128xf32>
    %c0_6 = arith.constant 0 : index
    %c0_7 = arith.constant 0 : index
    %8 = vector.load %arg7[%c0_6, %c0_7] : memref<8x128xf32, #tpu.memory_space<vmem>>, vector<8x128xf32>
    tpu.vector_store %arg7[%c0_6, %c0_7], %7 {strides = array<i32>} : memref<8x128xf32, #tpu.memory_space<vmem>>, vector<8x128xf32>,
    %c0_i32_8 = arith.constant 0 : i32
    %9 = arith.cmpi eq, %arg2, %c0_i32_8 : i32
    %10 = arith.extui %9 : i1 to i32
    %c0_i32_9 = arith.constant 0 : i32
    %11 = arith.cmpi ne, %10, %c0_i32_9 : i32
    scf.if %11 {
      %c0_10 = arith.constant 0 : index
      %c0_11 = arith.constant 0 : index
      %12 = vector.load %arg7[%c0_10, %c0_11] : memref<8x128xf32, #tpu.memory_space<vmem>>, vector<8x128xf32>
      %c0_12 = arith.constant 0 : index
      %c0_13 = arith.constant 0 : index
      %13 = vector.load %arg5[%c0_12, %c0_13] : memref<1x128xf32, #tpu.memory_space<vmem>>, vector<1x128xf32>
      %14 = vector.broadcast %13 : vector<1x128xf32> to vector<8x128xf32>
      %15 = arith.addf %12, %14 : vector<8x128xf32>
      %c0_14 = arith.constant 0 : index
      %c0_15 = arith.constant 0 : index
      %16 = vector.load %arg6[%c0_14, %c0_15] : memref<8x128xf32, #tpu.memory_space<vmem>>, vector<8x128xf32>
      tpu.vector_store %arg6[%c0_14, %c0_15], %15 {strides = array<i32>} : memref<8x128xf32, #tpu.memory_space<vmem>>, vector<8x128xf32>,
    } else {
    }
    return
  }
  func.func @transform_0(%arg0: i32, %arg1: i32, %arg2: i32) -> (i32, i32) {
    %c0_i32 = arith.constant 0 : i32
    return %arg0, %arg2 : i32, i32
  }
  func.func @transform_1(%arg0: i32, %arg1: i32, %arg2: i32) -> (i32, i32) {
    %c0_i32 = arith.constant 0 : i32
    return %arg2, %arg1 : i32, i32
  }
  func.func @transform_2(%arg0: i32, %arg1: i32, %arg2: i32) -> (i32, i32) {
    %c0_i32 = arith.constant 0 : i32
    %c0_i32_0 = arith.constant 0 : i32
    return %c0_i32, %arg1 : i32, i32
  }
  func.func @transform_3(%arg0: i32, %arg1: i32, %arg2: i32) -> (i32, i32) {
    %c0_i32 = arith.constant 0 : i32
    return %arg0, %arg1 : i32, i32
  }
}

</mosaic_0001>

<llo_original>
// kernel: tpu_custom_call.1
$region0: #{tpu_custom_call.1}
  #allocation0 [shape = 'u32[]', space=smem, size = 0x4, offset = 0x4, fixed_abs, tag = 'smem constant byte address 0x4 - core index']
  #allocation1 [shape = 'u32[144,128]{1,0:T(1,128)}', space=vmem, size = 0x12000, scoped, tag = 'internal scratch']
  #allocation2 [shape = 'f32[8,128]{1,0:T(8,128)}', space=vmem, size = 0x1000, scoped, tag = 'scratch operand']
  %s0 = inlined_call_operand.hbm [shape: f32[8,128], index: 0, kind: input, shape index: {}]
  %s1 = inlined_call_operand.hbm [shape: f32[128,128], index: 1, kind: input, shape index: {}]
  %s2 = inlined_call_operand.vmem [shape: f32[1,128], index: 2, kind: input, shape index: {}]
  %s3 = inlined_call_operand.hbm [shape: f32[8,128], index: 3, kind: output, shape index: {}]
  %s4 = sld [smem:[#allocation0]]
  $region38: #{tpu_custom_call.1} parent=0
    _
  %s6 = ssub.s32 1, %s4
  %s7 = scalar_select 0, %s6, %s4
  $region1: #{tpu_custom_call.1} parent=0
    #allocation3 [shape = 'u8[4096]{0}', space=vmem, size = 0x1000, scoped, tag = 'input window, operand 0, single buffered']
    #allocation4 [shape = 's32[1]{0}', space=sflag, size = 0x4, scoped, tag = 'scoped memory for tpu_custom_call.1']
    #allocation5 [shape = 's32[1]{0}', space=sflag, size = 0x4, scoped, tag = 'scoped memory for tpu_custom_call.1']
    #allocation6 [shape = 'u8[65536]{0}', space=vmem, size = 0x10000, scoped, tag = 'input window, operand 1, single buffered']
    #allocation7 [shape = 's32[1]{0}', space=sflag, size = 0x4, scoped, tag = 'scoped memory for tpu_custom_call.1']
    #allocation8 [shape = 'u8[4096]{0}', space=vmem, size = 0x1000, scoped, tag = 'output window, operand 0, single buffered']
    %8 = vsyncpa [#allocation4], 0
    %9 = vsyncpa [#allocation7], 0
    %10 = vsyncpa [#allocation5], 0
    // Predicated region
    $region2: #{tpu_custom_call.1} parent=1 // pred_check
      _
    $region3: #{tpu_custom_call.1} parent=1 // pred_check_branch
      %12 = sbr.rel (0) target = $region5
    $region4: #{tpu_custom_call.1} parent=1 // pred_region
      %s14 = ssub.s32 128, 128
      %15 = vsyncadd [#allocation4], %s14
      %s17 = sshll.u32 [#allocation3], 4
      %s18 = int_to_ptr.vmem [resolvable:$true] %s17
      %20 = dma.hbm_to_vmem [thread:$0]  %s0, 128, %s18, [#allocation4]
    $region5: #{tpu_custom_call.1} parent=1 // pred_fallthru
      _
    // Predicated region
    $region6: #{tpu_custom_call.1} parent=1 // pred_check
      _
    $region7: #{tpu_custom_call.1} parent=1 // pred_check_branch
      %22 = sbr.rel (0) target = $region9
    $region8: #{tpu_custom_call.1} parent=1 // pred_region
      %s24 = ssub.s32 2048, 2048
      %25 = vsyncadd [#allocation7], %s24
      %s26 = sshll.u32 [#allocation6], 4
      %s27 = int_to_ptr.vmem [resolvable:$true] %s26
      %32 = dma.hbm_to_vmem [thread:$0]  %s1, 2048, %s27, [#allocation7], 128, 128, 8
    $region9: #{tpu_custom_call.1} parent=1 // pred_fallthru
      _
    // Predicated region
    $region10: #{tpu_custom_call.1} parent=1 // pred_check
      _
    $region11: #{tpu_custom_call.1} parent=1 // pred_check_branch
      %34 = sbr.rel (0) target = $region13
    $region12: #{tpu_custom_call.1} parent=1 // pred_region
      _
    $region13: #{tpu_custom_call.1} parent=1 // pred_fallthru
      _
    // Predicated region
    $region14: #{tpu_custom_call.1} parent=1 // pred_check
      _
    $region15: #{tpu_custom_call.1} parent=1 // pred_check_branch
      %36 = sbr.rel (0) target = $region17
    $region16: #{tpu_custom_call.1} parent=1 // pred_region
      %37 = dma.done [#allocation4], 128
    $region17: #{tpu_custom_call.1} parent=1 // pred_fallthru
      _
    // Predicated region
    $region18: #{tpu_custom_call.1} parent=1 // pred_check
      _
    $region19: #{tpu_custom_call.1} parent=1 // pred_check_branch
      %39 = sbr.rel (0) target = $region21
    $region20: #{tpu_custom_call.1} parent=1 // pred_region
      %40 = dma.done [#allocation7], 2048
    $region21: #{tpu_custom_call.1} parent=1 // pred_fallthru
      _
    %p41 = scmp.eq.s32.totalorder 0, 0
    // Predicated region
    $region22: #{tpu_custom_call.1} parent=1 // pred_check
      %p42 = pneg %p41
    $region23: #{tpu_custom_call.1} parent=1 // pred_check_branch
      %44 = sbr.rel (%p42) target = $region25
    $region24: #{tpu_custom_call.1} parent=1 // pred_region
      %45 = vst [vmem:[#allocation2] sm:$0xff] 0.0
    $region25: #{tpu_custom_call.1} parent=1 // pred_fallthru
      _
    %v46 = vld [vmem:[#allocation2] sm:$0xff]
    %v47 = vld [vmem:[#allocation3] sm:$0xff]
    %v48 = vld [vmem:[#allocation6] sm:$0xff]
    %v49 = vld [vmem:[#allocation6 + $0x8] sm:$0xff]
    %v50 = vld [vmem:[#allocation6 + $0x10] sm:$0xff]
    %v51 = vld [vmem:[#allocation6 + $0x18] sm:$0xff]
    %v52 = vld [vmem:[#allocation6 + $0x20] sm:$0xff]
    %v53 = vld [vmem:[#allocation6 + $0x28] sm:$0xff]
    %v54 = vld [vmem:[#allocation6 + $0x30] sm:$0xff]
    %v55 = vld [vmem:[#allocation6 + $0x38] sm:$0xff]
    %v56 = vld [vmem:[#allocation6 + $0x40] sm:$0xff]
    %v57 = vld [vmem:[#allocation6 + $0x48] sm:$0xff]
    %v58 = vld [vmem:[#allocation6 + $0x50] sm:$0xff]
    %v59 = vld [vmem:[#allocation6 + $0x58] sm:$0xff]
    %v60 = vld [vmem:[#allocation6 + $0x60] sm:$0xff]
    %v61 = vld [vmem:[#allocation6 + $0x68] sm:$0xff]
    %v62 = vld [vmem:[#allocation6 + $0x70] sm:$0xff]
    %v63 = vld [vmem:[#allocation6 + $0x78] sm:$0xff]
    %64 = vmatprep.subr.mxu0 0.0
    %65 = vmatpush1.msra.mxu0 %v63
    %66 = vmatprep.subr.mxu0 0.0
    %67 = vmatpush1.msra.mxu0 %v62
    %68 = vmatprep.subr.mxu0 0.0
    %69 = vmatpush1.msra.mxu0 %v61
    %70 = vmatprep.subr.mxu0 0.0
    %71 = vmatpush1.msra.mxu0 %v60
    %72 = vmatprep.subr.mxu0 0.0
    %73 = vmatpush1.msra.mxu0 %v59
    %74 = vmatprep.subr.mxu0 0.0
    %75 = vmatpush1.msra.mxu0 %v58
    %76 = vmatprep.subr.mxu0 0.0
    %77 = vmatpush1.msra.mxu0 %v57
    %78 = vmatprep.subr.mxu0 0.0
    %79 = vmatpush1.msra.mxu0 %v56
    %80 = vmatprep.subr.mxu0 0.0
    %81 = vmatpush1.msra.mxu0 %v55
    %82 = vmatprep.subr.mxu0 0.0
    %83 = vmatpush1.msra.mxu0 %v54
    %84 = vmatprep.subr.mxu0 0.0
    %85 = vmatpush1.msra.mxu0 %v53
    %86 = vmatprep.subr.mxu0 0.0
    %87 = vmatpush1.msra.mxu0 %v52
    %88 = vmatprep.subr.mxu0 0.0
    %89 = vmatpush1.msra.mxu0 %v51
    %90 = vmatprep.subr.mxu0 0.0
    %91 = vmatpush1.msra.mxu0 %v50
    %92 = vmatprep.subr.mxu0 0.0
    %93 = vmatpush1.msra.mxu0 %v49
    %94 = vmatprep.subr.mxu0 0.0
    %95 = vmatpush1.msra.mxu0 %v48
    %96 = vmatprep.subr.mxu0 0.0
    %97 = vmatpush2.msra.mxu0 0.0
    %98 = vmatprep.subr.mxu0 0.0
    %99 = vmatpush2.msra.mxu0 0.0
    %100 = vmatprep.subr.mxu0 0.0
    %101 = vmatpush2.msra.mxu0 0.0
    %102 = vmatprep.subr.mxu0 0.0
    %103 = vmatpush2.msra.mxu0 0.0
    %104 = vmatprep.subr.mxu0 0.0
    %105 = vmatpush2.msra.mxu0 0.0
    %106 = vmatprep.subr.mxu0 0.0
    %107 = vmatpush2.msra.mxu0 0.0
    %108 = vmatprep.subr.mxu0 0.0
    %109 = vmatpush2.msra.mxu0 0.0
    %110 = vmatprep.subr.mxu0 0.0
    %111 = vmatpush2.msra.mxu0 0.0
    %112 = vmatprep.subr.mxu0 0.0
    %113 = vmatpush2.msra.mxu0 0.0
    %114 = vmatprep.subr.mxu0 0.0
    %115 = vmatpush2.msra.mxu0 0.0
    %116 = vmatprep.subr.mxu0 0.0
    %117 = vmatpush2.msra.mxu0 0.0
    %118 = vmatprep.subr.mxu0 0.0
    %119 = vmatpush2.msra.mxu0 0.0
    %120 = vmatprep.subr.mxu0 0.0
    %121 = vmatpush2.msra.mxu0 0.0
    %122 = vmatprep.subr.mxu0 0.0
    %123 = vmatpush2.msra.mxu0 0.0
    %124 = vmatprep.subr.mxu0 0.0
    %125 = vmatpush2.msra.mxu0 0.0
    %126 = vmatprep.subr.mxu0 0.0
    %127 = vmatpush2.msra.mxu0 0.0
    %128 = vmatprep.mubr.f32.mxu0 0.0
    %129 = vmatmul.mubr.f32.gmra.mxu0 %v47
    %v130 = vpop.f32.mrf.mxu0
    %v131 = vadd.f32 0.0, %v130
    %v132 = vpop.f32.mrf.mxu0
    %133 = vdwg.mxu0
    %v134 = vadd.f32 %v46, %v131
    %135 = vst [vmem:[#allocation2] sm:$0xff] %v134
    // Predicated region
    $region26: #{tpu_custom_call.1} parent=1 // pred_check
      %p136 = pneg %p41
    $region27: #{tpu_custom_call.1} parent=1 // pred_check_branch
      %138 = sbr.rel (%p136) target = $region29
    $region28: #{tpu_custom_call.1} parent=1 // pred_region
      %v139 = vld [vmem:[#allocation2] sm:$0xff]
      %v140 = vld [vmem:[%s2] sm:$0x1]
      %v142 = vlaneseq
      %v143 = vshrl.u32 %v142, 7
      %v144 = vsub.s32 0, %v143
      %v145 = vrot.slane %v140, %v144
      %v147 = vadd.f32 %v139, %v145
      %148 = vst [vmem:[#allocation8] sm:$0xff] %v147
    $region29: #{tpu_custom_call.1} parent=1 // pred_fallthru
      _
    // Predicated region
    $region30: #{tpu_custom_call.1} parent=1 // pred_check
      _
    $region31: #{tpu_custom_call.1} parent=1 // pred_check_branch
      %150 = sbr.rel (0) target = $region33
    $region32: #{tpu_custom_call.1} parent=1 // pred_region
      %s152 = ssub.s32 128, 128
      %153 = vsyncadd [#allocation5], %s152
      %s155 = sshll.u32 [#allocation8], 4
      %s156 = int_to_ptr.vmem [resolvable:$true] %s155
      %158 = dma.vmem_to_hbm [thread:$0]  %s156, 128, %s3, [#allocation5]
    $region33: #{tpu_custom_call.1} parent=1 // pred_fallthru
      _
    // Predicated region
    $region34: #{tpu_custom_call.1} parent=1 // pred_check
      _
    $region35: #{tpu_custom_call.1} parent=1 // pred_check_branch
      %160 = sbr.rel (0) target = $region37
    $region36: #{tpu_custom_call.1} parent=1 // pred_region
      %161 = dma.done [#allocation5], 128
    $region37: #{tpu_custom_call.1} parent=1 // pred_fallthru
      _
    %162 = vsyncpa [#allocation4], 1
    %163 = vsyncpa [#allocation7], 1
    %164 = vsyncpa [#allocation5], 1

// kernel: tpu_custom_call.1
$region0: #{tpu_custom_call.1}
  #allocation0 [shape = 'u32[]', space=smem, size = 0x4, offset = 0x4, fixed_abs, tag = 'smem constant byte address 0x4 - core index']
  #allocation1 [shape = 'u32[144,128]{1,0:T(1,128)}', space=vmem, size = 0x12000, scoped, tag = 'internal scratch']
  #allocation2 [shape = 'f32[8,128]{1,0:T(8,128)}', space=vmem, size = 0x1000, scoped, tag = 'scratch operand']
  %s0 = inlined_call_operand.hbm [shape: f32[8,128], index: 0, kind: input, shape index: {}]
  %s1 = inlined_call_operand.hbm [shape: f32[128,128], index: 1, kind: input, shape index: {}]
  %s2 = inlined_call_operand.vmem [shape: f32[1,128], index: 2, kind: input, shape index: {}]
  %s3 = inlined_call_operand.hbm [shape: f32[8,128], index: 3, kind: output, shape index: {}]
  %s4 = sld [smem:[#allocation0]]
  $region38: #{tpu_custom_call.1} parent=0
    _
  %s6 = ssub.s32 1, %s4
  %s7 = scalar_select 0, %s6, %s4
  $region1: #{tpu_custom_call.1} parent=0
    #allocation3 [shape = 'u8[4096]{0}', space=vmem, size = 0x1000, scoped, tag = 'input window, operand 0, single buffered']
    #allocation4 [shape = 's32[1]{0}', space=sflag, size = 0x4, scoped, tag = 'scoped memory for tpu_custom_call.1']
    #allocation5 [shape = 's32[1]{0}', space=sflag, size = 0x4, scoped, tag = 'scoped memory for tpu_custom_call.1']
    #allocation6 [shape = 'u8[65536]{0}', space=vmem, size = 0x10000, scoped, tag = 'input window, operand 1, single buffered']
    #allocation7 [shape = 's32[1]{0}', space=sflag, size = 0x4, scoped, tag = 'scoped memory for tpu_custom_call.1']
    #allocation8 [shape = 'u8[4096]{0}', space=vmem, size = 0x1000, scoped, tag = 'output window, operand 0, single buffered']
    %8 = vsyncpa [#allocation4], 0
    %9 = vsyncpa [#allocation7], 0
    %10 = vsyncpa [#allocation5], 0
    // Predicated region
    $region2: #{tpu_custom_call.1} parent=1 // pred_check
      _
    $region3: #{tpu_custom_call.1} parent=1 // pred_check_branch
      %12 = sbr.rel (0) target = $region5
    $region4: #{tpu_custom_call.1} parent=1 // pred_region
      %s14 = ssub.s32 128, 128
      %15 = vsyncadd [#allocation4], %s14
      %s17 = sshll.u32 [#allocation3], 4
      %s18 = int_to_ptr.vmem [resolvable:$true] %s17
      %20 = dma.hbm_to_vmem [thread:$0]  %s0, 128, %s18, [#allocation4]
    $region5: #{tpu_custom_call.1} parent=1 // pred_fallthru
      _
    // Predicated region
    $region6: #{tpu_custom_call.1} parent=1 // pred_check
      _
    $region7: #{tpu_custom_call.1} parent=1 // pred_check_branch
      %22 = sbr.rel (0) target = $region9
    $region8: #{tpu_custom_call.1} parent=1 // pred_region
      %s24 = ssub.s32 2048, 2048
      %25 = vsyncadd [#allocation7], %s24
      %s26 = sshll.u32 [#allocation6], 4
      %s27 = int_to_ptr.vmem [resolvable:$true] %s26
      %32 = dma.hbm_to_vmem [thread:$0]  %s1, 2048, %s27, [#allocation7], 128, 128, 8
    $region9: #{tpu_custom_call.1} parent=1 // pred_fallthru
      _
    // Predicated region
    $region10: #{tpu_custom_call.1} parent=1 // pred_check
      _
    $region11: #{tpu_custom_call.1} parent=1 // pred_check_branch
      %34 = sbr.rel (0) target = $region13
    $region12: #{tpu_custom_call.1} parent=1 // pred_region
      _
    $region13: #{tpu_custom_call.1} parent=1 // pred_fallthru
      _
    // Predicated region
    $region14: #{tpu_custom_call.1} parent=1 // pred_check
      _
    $region15: #{tpu_custom_call.1} parent=1 // pred_check_branch
      %36 = sbr.rel (0) target = $region17
    $region16: #{tpu_custom_call.1} parent=1 // pred_region
      %37 = dma.done [#allocation4], 128
    $region17: #{tpu_custom_call.1} parent=1 // pred_fallthru
      _
    // Predicated region
    $region18: #{tpu_custom_call.1} parent=1 // pred_check
      _
    $region19: #{tpu_custom_call.1} parent=1 // pred_check_branch
      %39 = sbr.rel (0) target = $region21
    $region20: #{tpu_custom_call.1} parent=1 // pred_region
      %40 = dma.done [#allocation7], 2048
    $region21: #{tpu_custom_call.1} parent=1 // pred_fallthru
      _
    %p41 = scmp.eq.s32.totalorder 0, 0
    // Predicated region
    $region22: #{tpu_custom_call.1} parent=1 // pred_check
      %p42 = pneg %p41
    $region23: #{tpu_custom_call.1} parent=1 // pred_check_branch
      %44 = sbr.rel (%p42) target = $region25
    $region24: #{tpu_custom_call.1} parent=1 // pred_region
      %45 = vst [vmem:[#allocation2] sm:$0xff] 0.0
    $region25: #{tpu_custom_call.1} parent=1 // pred_fallthru
      _
    %v46 = vld [vmem:[#allocation2] sm:$0xff]
    %v47 = vld [vmem:[#allocation3] sm:$0xff]
    %v48 = vld [vmem:[#allocation6] sm:$0xff]
    %v49 = vld [vmem:[#allocation6 + $0x8] sm:$0xff]
    %v50 = vld [vmem:[#allocation6 + $0x10] sm:$0xff]
    %v51 = vld [vmem:[#allocation6 + $0x18] sm:$0xff]
    %v52 = vld [vmem:[#allocation6 + $0x20] sm:$0xff]
    %v53 = vld [vmem:[#allocation6 + $0x28] sm:$0xff]
    %v54 = vld [vmem:[#allocation6 + $0x30] sm:$0xff]
    %v55 = vld [vmem:[#allocation6 + $0x38] sm:$0xff]
    %v56 = vld [vmem:[#allocation6 + $0x40] sm:$0xff]
    %v57 = vld [vmem:[#allocation6 + $0x48] sm:$0xff]
    %v58 = vld [vmem:[#allocation6 + $0x50] sm:$0xff]
    %v59 = vld [vmem:[#allocation6 + $0x58] sm:$0xff]
    %v60 = vld [vmem:[#allocation6 + $0x60] sm:$0xff]
    %v61 = vld [vmem:[#allocation6 + $0x68] sm:$0xff]
    %v62 = vld [vmem:[#allocation6 + $0x70] sm:$0xff]
    %v63 = vld [vmem:[#allocation6 + $0x78] sm:$0xff]
    %64 = vmatprep.subr.mxu0 0.0
    %65 = vmatpush1.msra.mxu0 %v63
    %66 = vmatprep.subr.mxu0 0.0
    %67 = vmatpush1.msra.mxu0 %v62
    %68 = vmatprep.subr.mxu0 0.0
    %69 = vmatpush1.msra.mxu0 %v61
    %70 = vmatprep.subr.mxu0 0.0
    %71 = vmatpush1.msra.mxu0 %v60
    %72 = vmatprep.subr.mxu0 0.0
    %73 = vmatpush1.msra.mxu0 %v59
    %74 = vmatprep.subr.mxu0 0.0
    %75 = vmatpush1.msra.mxu0 %v58
    %76 = vmatprep.subr.mxu0 0.0
    %77 = vmatpush1.msra.mxu0 %v57
    %78 = vmatprep.subr.mxu0 0.0
    %79 = vmatpush1.msra.mxu0 %v56
    %80 = vmatprep.subr.mxu0 0.0
    %81 = vmatpush1.msra.mxu0 %v55
    %82 = vmatprep.subr.mxu0 0.0
    %83 = vmatpush1.msra.mxu0 %v54
    %84 = vmatprep.subr.mxu0 0.0
    %85 = vmatpush1.msra.mxu0 %v53
    %86 = vmatprep.subr.mxu0 0.0
    %87 = vmatpush1.msra.mxu0 %v52
    %88 = vmatprep.subr.mxu0 0.0
    %89 = vmatpush1.msra.mxu0 %v51
    %90 = vmatprep.subr.mxu0 0.0
    %91 = vmatpush1.msra.mxu0 %v50
    %92 = vmatprep.subr.mxu0 0.0
    %93 = vmatpush1.msra.mxu0 %v49
    %94 = vmatprep.subr.mxu0 0.0
    %95 = vmatpush1.msra.mxu0 %v48
    %96 = vmatprep.subr.mxu0 0.0
    %97 = vmatpush2.msra.mxu0 0.0
    %98 = vmatprep.subr.mxu0 0.0
    %99 = vmatpush2.msra.mxu0 0.0
    %100 = vmatprep.subr.mxu0 0.0
    %101 = vmatpush2.msra.mxu0 0.0
    %102 = vmatprep.subr.mxu0 0.0
    %103 = vmatpush2.msra.mxu0 0.0
    %104 = vmatprep.subr.mxu0 0.0
    %105 = vmatpush2.msra.mxu0 0.0
    %106 = vmatprep.subr.mxu0 0.0
    %107 = vmatpush2.msra.mxu0 0.0
    %108 = vmatprep.subr.mxu0 0.0
    %109 = vmatpush2.msra.mxu0 0.0
    %110 = vmatprep.subr.mxu0 0.0
    %111 = vmatpush2.msra.mxu0 0.0
    %112 = vmatprep.subr.mxu0 0.0
    %113 = vmatpush2.msra.mxu0 0.0
    %114 = vmatprep.subr.mxu0 0.0
    %115 = vmatpush2.msra.mxu0 0.0
    %116 = vmatprep.subr.mxu0 0.0
    %117 = vmatpush2.msra.mxu0 0.0
    %118 = vmatprep.subr.mxu0 0.0
    %119 = vmatpush2.msra.mxu0 0.0
    %120 = vmatprep.subr.mxu0 0.0
    %121 = vmatpush2.msra.mxu0 0.0
    %122 = vmatprep.subr.mxu0 0.0
    %123 = vmatpush2.msra.mxu0 0.0
    %124 = vmatprep.subr.mxu0 0.0
    %125 = vmatpush2.msra.mxu0 0.0
    %126 = vmatprep.subr.mxu0 0.0
    %127 = vmatpush2.msra.mxu0 0.0
    %128 = vmatprep.mubr.f32.mxu0 0.0
    %129 = vmatmul.mubr.f32.gmra.mxu0 %v47
    %v130 = vpop.f32.mrf.mxu0
    %v131 = vadd.f32 0.0, %v130
    %v132 = vpop.f32.mrf.mxu0
    %133 = vdwg.mxu0
    %v134 = vadd.f32 %v46, %v131
    %135 = vst [vmem:[#allocation2] sm:$0xff] %v134
    // Predicated region
    $region26: #{tpu_custom_call.1} parent=1 // pred_check
      %p136 = pneg %p41
    $region27: #{tpu_custom_call.1} parent=1 // pred_check_branch
      %138 = sbr.rel (%p136) target = $region29
    $region28: #{tpu_custom_call.1} parent=1 // pred_region
      %v139 = vld [vmem:[#allocation2] sm:$0xff]
      %v140 = vld [vmem:[%s2] sm:$0x1]
      %v142 = vlaneseq
      %v143 = vshrl.u32 %v142, 7
      %v144 = vsub.s32 0, %v143
      %v145 = vrot.slane %v140, %v144
      %v147 = vadd.f32 %v139, %v145
      %148 = vst [vmem:[#allocation8] sm:$0xff] %v147
    $region29: #{tpu_custom_call.1} parent=1 // pred_fallthru
      _
    // Predicated region
    $region30: #{tpu_custom_call.1} parent=1 // pred_check
      _
    $region31: #{tpu_custom_call.1} parent=1 // pred_check_branch
      %150 = sbr.rel (0) target = $region33
    $region32: #{tpu_custom_call.1} parent=1 // pred_region
      %s152 = ssub.s32 128, 128
      %153 = vsyncadd [#allocation5], %s152
      %s155 = sshll.u32 [#allocation8], 4
      %s156 = int_to_ptr.vmem [resolvable:$true] %s155
      %158 = dma.vmem_to_hbm [thread:$0]  %s156, 128, %s3, [#allocation5]
    $region33: #{tpu_custom_call.1} parent=1 // pred_fallthru
      _
    // Predicated region
    $region34: #{tpu_custom_call.1} parent=1 // pred_check
      _
    $region35: #{tpu_custom_call.1} parent=1 // pred_check_branch
      %160 = sbr.rel (0) target = $region37
    $region36: #{tpu_custom_call.1} parent=1 // pred_region
      %161 = dma.done [#allocation5], 128
    $region37: #{tpu_custom_call.1} parent=1 // pred_fallthru
      _
    %162 = vsyncpa [#allocation4], 1
    %163 = vsyncpa [#allocation7], 1
    %164 = vsyncpa [#allocation5], 1

</llo_original>
